<compile_context>
chip_gen: v6e
topology: v6e:2x2x1
jax: 0.10.0
libtpu: 0.0.40
codegen_flags: <defaults>
</compile_context>

<pallas_src>
import jax
import jax.numpy as jnp
from jax.experimental import pallas as pl
from jax.experimental.pallas import tpu as pltpu

LN_EPS = 1e-5  # torch.nn.LayerNorm default

_MIN_GRID_STEPS = 4            # >= 2 pipelined steps per TensorCore on v7x
_DEFAULT_VMEM_CAP = 64 * 1024 * 1024   # conservative fallback (v7x per-TC VMEM)


# --------------------------------------------------------------------------
# Kernels
# --------------------------------------------------------------------------

def _merge_norm_reduce_flat_kernel(ev_ref, od_ref, we_ref, wo_ref, b_ref, o_ref):
    """Fused 2x2-merge + LayerNorm + Linear(4C -> 2C), flattened-token variant.

    Used only when w2 is a multiple of the sublane packing for x.dtype, so the
    (tbh, w2, 2C) -> (tbh*w2, 2C) collapse is a free layout change.

    ev_ref: (tbh, w2, 2C)  even-row halves ([x0 | x2] per merged token)
    od_ref: (tbh, w2, 2C)  odd-row halves  ([x1 | x3] per merged token)
    we_ref: (2C, Cout)     weight rows for the even half (LN gamma folded in)
    wo_ref: (2C, Cout)     weight rows for the odd half  (LN gamma folded in)
    b_ref:  (1, Cout)      beta @ W (LN bias folded through the linear), f32
    o_ref:  (tbh*w2, Cout)
    """
    tbh, w2, c2 = ev_ref.shape
    tm = tbh * w2

    ev32 = ev_ref[...].reshape(tm, c2).astype(jnp.float32)
    od32 = od_ref[...].reshape(tm, c2).astype(jnp.float32)

    # Single-pass LayerNorm statistics over the full 4C merged feature (f32).
    inv_n = 1.0 / (2 * c2)
    s1 = (jnp.sum(ev32, axis=-1, keepdims=True)
          + jnp.sum(od32, axis=-1, keepdims=True))
    s2 = (jnp.sum(ev32 * ev32, axis=-1, keepdims=True)
          + jnp.sum(od32 * od32, axis=-1, keepdims=True))
    mean = s1 * inv_n
    var = jnp.maximum(s2 * inv_n - mean * mean, 0.0)
    rstd = jax.lax.rsqrt(var + LN_EPS)

    # Normalize (affine already folded into the weights); run the MXU in the
    # prepared-weight dtype with f32 accumulation.  The odd half is normalized
    # after the first dot so the even-side f32 temporaries can die early.
    evn = ((ev32 - mean) * rstd).astype(we_ref.dtype)
    acc = jnp.dot(evn, we_ref[...], preferred_element_type=jnp.float32)
    odn = ((od32 - mean) * rstd).astype(wo_ref.dtype)
    acc = acc + jnp.dot(odn, wo_ref[...], preferred_element_type=jnp.float32)
    o_ref[...] = (acc + b_ref[...]).astype(o_ref.dtype)


def _merge_norm_reduce_loop_kernel(ev_ref, od_ref, we_ref, wo_ref, b_ref, o_ref):
    """Same fusion, 3-D variant for sublane-misaligned w2 (e.g. Swin 28/14/7).

    Avoids both an HBM re-pad of the activations and an in-kernel relayout by
    looping the (w2, 2C) @ (2C, Cout) matmul over the tile's merged rows.
    o_ref: (tbh, w2, Cout)
    """
    tbh, w2, c2 = ev_ref.shape
    inv_n = 1.0 / (2 * c2)
    we = we_ref[...]
    wo = wo_ref[...]
    b = b_ref[...]

    def body(r, carry):
        ev32 = ev_ref[r].astype(jnp.float32)        # (w2, 2C)
        od32 = od_ref[r].astype(jnp.float32)
        s1 = (jnp.sum(ev32, axis=-1, keepdims=True)
              + jnp.sum(od32, axis=-1, keepdims=True))
        s2 = (jnp.sum(ev32 * ev32, axis=-1, keepdims=True)
              + jnp.sum(od32 * od32, axis=-1, keepdims=True))
        mean = s1 * inv_n
        var = jnp.maximum(s2 * inv_n - mean * mean, 0.0)
        rstd = jax.lax.rsqrt(var + LN_EPS)
        evn = ((ev32 - mean) * rstd).astype(we.dtype)
        odn = ((od32 - mean) * rstd).astype(wo.dtype)
        acc = jnp.dot(evn, we, preferred_element_type=jnp.float32)
        acc = acc + jnp.dot(odn, wo, preferred_element_type=jnp.float32)
        o_ref[r] = (acc + b).astype(o_ref.dtype)
        return carry

    jax.lax.fori_loop(0, tbh, body, 0)


# --------------------------------------------------------------------------
# Parameter prep (hoist out of the forward hot path)
# --------------------------------------------------------------------------

def prepare_patch_merging_params(gamma, beta, w_reduction,
                                 compute_dtype=jnp.float32):
    """Fold the LayerNorm affine into the reduction weight and permute its rows
    into the kernel's [x0, x2 | x1, x3] feature order.  Do this ONCE at
    parameter-load time.  For v5e (no native f32 MXU path) prefer
    compute_dtype=jnp.bfloat16 even when activations are f32.
    """
    c4 = gamma.shape[0]
    c = c4 // 4
    w_t = w_reduction.astype(jnp.float32).T                  # (4C, Cout)
    w_fused = gamma.astype(jnp.float32)[:, None] * w_t       # fold LN scale
    bias = beta.astype(jnp.float32)[None, :] @ w_t           # (1, Cout)
    # torch feature order is [x0, x1, x2, x3]; kernel order is [x0, x2 | x1, x3]
    w_even = jnp.concatenate([w_fused[0:c], w_fused[2 * c:3 * c]], axis=0)
    w_odd = jnp.concatenate([w_fused[c:2 * c], w_fused[3 * c:4 * c]], axis=0)
    return (w_even.astype(compute_dtype), w_odd.astype(compute_dtype),
            bias.astype(jnp.float32))


# --------------------------------------------------------------------------
# Tiling / VMEM sizing
# --------------------------------------------------------------------------

def _vmem_budgets():
    """(tile-sizing budget, scoped vmem limit), derived from the running chip."""
    try:
        cap = int(pltpu.get_tpu_info().vmem_capacity_bytes)
    except Exception:
        cap = _DEFAULT_VMEM_CAP
    budget = max(cap // 2, 8 * 1024 * 1024)           # ~50% for our streams+temps
    limit = max(int(cap * 0.7), budget + (4 << 20))   # ~70% scoped limit
    return budget, limit


def _pick_row_tile(bh2, w2, c2, c_out, x_bytes, w_bytes, out_bytes,
                   token_tile, vmem_budget):
    """Merged-patch rows (B*H2 units) processed per grid step."""
    # Grid-invariant streams (weights + bias).  Budgeted at 2 buffers in case
    # the pipeline still double-buffers them despite pl.Buffered(1).
    fixed = 2 * (2 * c2 * c_out * w_bytes + c_out * 4)
    # Per merged token: double-buffered even/odd input streams, double-buffered
    # output stream, plus in-kernel f32 / low-precision temporaries
    # (ev32/od32, squares, normalized copies, f32 accumulator).
    per_tok = (2 * (2 * c2 * x_bytes)
               + 2 * (c_out * out_bytes)
               + 5 * c2 * 4 + 4 * c_out)
    avail = vmem_budget - fixed
    by_budget = max(1, avail // max(per_tok * w2, 1)) if avail > 0 else 1
    by_cap = max(1, token_tile // w2)
    tbh = min(int(by_budget), by_cap, bh2)
    # Keep >= _MIN_GRID_STEPS grid steps (when there are enough rows) so each
    # v7x TensorCore gets >= 2 pipelined iterations of DMA/compute overlap.
    if bh2 >= _MIN_GRID_STEPS:
        tbh = min(tbh, max(1, bh2 // _MIN_GRID_STEPS))
    return max(1, tbh)


def _const_spec(block_shape):
    """Full-array, grid-invariant stream.  Request single buffering (a constant
    block gains nothing from double-buffering); fall back cleanly if this JAX
    version's BlockSpec does not accept pipeline_mode."""
    index_map = lambda i: (0,) * len(block_shape)
    try:
        return pl.BlockSpec(block_shape, index_map, pipeline_mode=pl.Buffered(1))
    except Exception:
        return pl.BlockSpec(block_shape, index_map)


# --------------------------------------------------------------------------
# Forward
# --------------------------------------------------------------------------

def patch_merging_forward(x, gamma=None, beta=None, w_reduction=None, *,
                          params=None, compute_dtype=None, token_tile=1024):
    """Equivalent of PatchMerging.forward.

    x:           (B, H, W, C)  channels-last
    gamma/beta:  (4C,)         LayerNorm params          } pass these three,
    w_reduction: (2C, 4C)      torch nn.Linear weight    } or `params`
    params:      output of prepare_patch_merging_params (hoist to init)
    compute_dtype: matmul/weight dtype when params are built here
                   (default: x.dtype; pass jnp.float32 for strict parity)
    returns:     (B, ceil(H/2), ceil(W/2), 2C)
    """
    B, H, W, C = x.shape
    if params is None:
        if compute_dtype is None:
            compute_dtype = x.dtype
        params = prepare_patch_merging_params(gamma, beta, w_reduction,
                                              compute_dtype)
    w_even, w_odd, bias = params
    c2 = 2 * C
    c_out = w_even.shape[1]

    # Parity padding only (torch F.pad equivalent) -- required by the op.
    pad_h, pad_w = H % 2, W % 2
    if pad_h or pad_w:
        x = jnp.pad(x, ((0, 0), (0, pad_h), (0, pad_w), (0, 0)))
    h2, w2 = (H + pad_h) // 2, (W + pad_w) // 2
    bh2 = B * h2

    # Free row-major regrouping: (B, 2*h2, 2*w2, C) -> (B*h2, row-parity, w2, 2C).
    # The trailing 2C groups the (w-even, w-odd) pixel pair.
    x4 = x.reshape(bh2, 2, w2, c2)

    x_bytes = jnp.dtype(x.dtype).itemsize
    w_bytes = jnp.dtype(w_even.dtype).itemsize
    vmem_budget, vmem_limit = _vmem_budgets()
    tbh = _pick_row_tile(bh2, w2, c2, c_out, x_bytes, w_bytes, x_bytes,
                         token_tile, vmem_budget)
    grid = (pl.cdiv(bh2, tbh),)

    in_specs = [
        # even / odd row-parity slabs of the same (free) 4-D view of x
        pl.BlockSpec((tbh, pl.Squeezed(), w2, c2), lambda i: (i, 0, 0, 0)),
        pl.BlockSpec((tbh, pl.Squeezed(), w2, c2), lambda i: (i, 1, 0, 0)),
        _const_spec((c2, c_out)),
        _const_spec((c2, c_out)),
        _const_spec((1, c_out)),
    ]
    compiler_params = pltpu.CompilerParams(
        dimension_semantics=("parallel",),
        vmem_limit_bytes=vmem_limit,
    )

    sublane_pack = (8 * 4) // x_bytes   # 8 rows (f32) / 16 rows (bf16) per tile
    if w2 % sublane_pack == 0:
        # Layout-trivial in-kernel flatten -> one big matmul per tile.
        tm = tbh * w2
        out = pl.pallas_call(
            _merge_norm_reduce_flat_kernel,
            out_shape=jax.ShapeDtypeStruct((bh2 * w2, c_out), x.dtype),
            grid_spec=pltpu.PrefetchScalarGridSpec(
                num_scalar_prefetch=0, grid=grid, in_specs=in_specs,
                out_specs=pl.BlockSpec((tm, c_out), lambda i: (i, 0))),
            compiler_params=compiler_params,
        )(x4, x4, w_even, w_odd, bias)
    else:
        # Sublane-misaligned w2 (real Swin stages: 28/14/7): keep the block 3-D
        # and loop the matmul over merged rows.  No HBM re-pad, no relayout.
        out = pl.pallas_call(
            _merge_norm_reduce_loop_kernel,
            out_shape=jax.ShapeDtypeStruct((bh2, w2, c_out), x.dtype),
            grid_spec=pltpu.PrefetchScalarGridSpec(
                num_scalar_prefetch=0, grid=grid, in_specs=in_specs,
                out_specs=pl.BlockSpec((tbh, w2, c_out), lambda i: (i, 0, 0))),
            compiler_params=compiler_params,
        )(x4, x4, w_even, w_odd, bias)

    return out.reshape(B, h2, w2, c_out)


# --------------------------------------------------------------------------
# Reference + tests
# --------------------------------------------------------------------------

def _reference_forward(x, gamma, beta, w_reduction):
    """Pure-JAX reference mirroring the torch module."""
    B, H, W, C = x.shape
    if H % 2 or W % 2:
        x = jnp.pad(x, ((0, 0), (0, H % 2), (0, W % 2), (0, 0)))
    x = x.astype(jnp.float32)
    x0 = x[:, 0::2, 0::2, :]
    x1 = x[:, 1::2, 0::2, :]
    x2 = x[:, 0::2, 1::2, :]
    x3 = x[:, 1::2, 1::2, :]
    m = jnp.concatenate([x0, x1, x2, x3], axis=-1)
    mu = jnp.mean(m, axis=-1, keepdims=True)
    var = jnp.mean((m - mu) ** 2, axis=-1, keepdims=True)
    mn = (m - mu) / jnp.sqrt(var + LN_EPS) * gamma + beta
    return mn @ w_reduction.T.astype(jnp.float32)


if __name__ == "__main__":
    key = jax.random.PRNGKey(0)
    k_x, k_g, k_b, k_w = jax.random.split(key, 4)

    # --- test 1: f32, even spatial dims, prepared (hoisted) params ---
    B, H, W, dim = 2, 16, 16, 4
    x = jax.random.normal(k_x, (B, H, W, dim), dtype=jnp.float32)
    gamma = 1.0 + 0.1 * jax.random.normal(k_g, (4 * dim,), dtype=jnp.float32)
    beta = 0.1 * jax.random.normal(k_b, (4 * dim,), dtype=jnp.float32)
    w_red = jax.random.normal(k_w, (2 * dim, 4 * dim), dtype=jnp.float32) * 0.05

    params = prepare_patch_merging_params(gamma, beta, w_red, jnp.float32)
    out = jax.block_until_ready(patch_merging_forward(x, params=params))
    ref = _reference_forward(x, gamma, beta, w_red)
    assert out.shape == (B, H // 2, W // 2, 2 * dim), out.shape
    assert jnp.allclose(out, ref, atol=1e-4, rtol=1e-4), (
        float(jnp.max(jnp.abs(out - ref))))

    # --- test 2: odd spatial dims (parity pad + misaligned-w2 loop path) ---
    x_odd = x[:, :15, :13, :]
    out_odd = jax.block_until_ready(
        patch_merging_forward(x_odd, gamma, beta, w_red,
                              compute_dtype=jnp.float32))
    ref_odd = _reference_forward(x_odd, gamma, beta, w_red)
    assert out_odd.shape == (B, 8, 7, 2 * dim), out_odd.shape
    assert jnp.allclose(out_odd, ref_odd, atol=1e-4, rtol=1e-4), (
        float(jnp.max(jnp.abs(out_odd - ref_odd))))

    # --- test 3: bf16 activations / bf16 MXU path ---
    x16 = jax.random.normal(k_x, (1, 32, 32, 8), dtype=jnp.float32)
    g16 = 1.0 + 0.1 * jax.random.normal(k_g, (32,), dtype=jnp.float32)
    b16 = 0.1 * jax.random.normal(k_b, (32,), dtype=jnp.float32)
    w16 = jax.random.normal(k_w, (16, 32), dtype=jnp.float32) * 0.1
    out16 = jax.block_until_ready(
        patch_merging_forward(x16.astype(jnp.bfloat16), g16, b16, w16))
    ref16 = _reference_forward(x16.astype(jnp.bfloat16).astype(jnp.float32),
                               g16, b16, w16)
    assert out16.dtype == jnp.bfloat16 and out16.shape == (1, 16, 16, 16)
    assert jnp.allclose(out16.astype(jnp.float32), ref16, atol=5e-2, rtol=5e-2)

    print("KERNEL_OK")
</pallas_src>

<mosaic_0001>
module attributes {stable_mosaic.version = 11 : i64} {
  func.func @_merge_norm_reduce_flat_kernel(%arg0: i32, %arg1: memref<4x1x8x8xf32, #tpu.memory_space<vmem>>, %arg2: memref<4x1x8x8xf32, #tpu.memory_space<vmem>>, %arg3: memref<8x8xf32, #tpu.memory_space<vmem>>, %arg4: memref<8x8xf32, #tpu.memory_space<vmem>>, %arg5: memref<1x8xf32, #tpu.memory_space<vmem>>, %arg6: memref<32x8xf32, #tpu.memory_space<vmem>>) attributes {dimension_semantics = [#tpu.dimension_semantics<parallel>], iteration_bounds = array<i64: 4>, scalar_prefetch = 0 : i64, scratch_operands = 0 : i64, tpu.core_type = #tpu.core_type<tc>, window_params = [{transform_indices = @transform_0, window_bounds = array<i64: 4, 1, 8, 8>}, {transform_indices = @transform_1, window_bounds = array<i64: 4, 1, 8, 8>}, {pipeline_mode = #tpu.pipeline_mode<synchronous>, transform_indices = @transform_2, window_bounds = array<i64: 8, 8>}, {pipeline_mode = #tpu.pipeline_mode<synchronous>, transform_indices = @transform_3, window_bounds = array<i64: 8, 8>}, {pipeline_mode = #tpu.pipeline_mode<synchronous>, transform_indices = @transform_4, window_bounds = array<i64: 1, 8>}, {transform_indices = @transform_5, window_bounds = array<i64: 32, 8>}]} {
    %c0 = arith.constant 0 : index
    %c0_0 = arith.constant 0 : index
    %c0_1 = arith.constant 0 : index
    %c0_2 = arith.constant 0 : index
    %0 = vector.load %arg1[%c0, %c0_0, %c0_1, %c0_2] : memref<4x1x8x8xf32, #tpu.memory_space<vmem>>, vector<4x1x8x8xf32>
    %1 = vector.shape_cast %0 : vector<4x1x8x8xf32> to vector<4x8x8xf32>
    %2 = vector.shape_cast %1 : vector<4x8x8xf32> to vector<32x8xf32>
    %c0_3 = arith.constant 0 : index
    %c0_4 = arith.constant 0 : index
    %c0_5 = arith.constant 0 : index
    %c0_6 = arith.constant 0 : index
    %3 = vector.load %arg2[%c0_3, %c0_4, %c0_5, %c0_6] : memref<4x1x8x8xf32, #tpu.memory_space<vmem>>, vector<4x1x8x8xf32>
    %4 = vector.shape_cast %3 : vector<4x1x8x8xf32> to vector<4x8x8xf32>
    %5 = vector.shape_cast %4 : vector<4x8x8xf32> to vector<32x8xf32>
    %cst = arith.constant dense<0.000000e+00> : vector<32xf32>
    %6 = vector.multi_reduction <add>, %2, %cst [1] : vector<32x8xf32> to vector<32xf32>
    %7 = vector.shape_cast %6 : vector<32xf32> to vector<32x1xf32>
    %cst_7 = arith.constant dense<0.000000e+00> : vector<32xf32>
    %8 = vector.multi_reduction <add>, %5, %cst_7 [1] : vector<32x8xf32> to vector<32xf32>
    %9 = vector.shape_cast %8 : vector<32xf32> to vector<32x1xf32>
    %10 = arith.addf %7, %9 : vector<32x1xf32>
    %11 = arith.mulf %2, %2 : vector<32x8xf32>
    %cst_8 = arith.constant dense<0.000000e+00> : vector<32xf32>
    %12 = vector.multi_reduction <add>, %11, %cst_8 [1] : vector<32x8xf32> to vector<32xf32>
    %13 = vector.shape_cast %12 : vector<32xf32> to vector<32x1xf32>
    %14 = arith.mulf %5, %5 : vector<32x8xf32>
    %cst_9 = arith.constant dense<0.000000e+00> : vector<32xf32>
    %15 = vector.multi_reduction <add>, %14, %cst_9 [1] : vector<32x8xf32> to vector<32xf32>
    %16 = vector.shape_cast %15 : vector<32xf32> to vector<32x1xf32>
    %17 = arith.addf %13, %16 : vector<32x1xf32>
    %cst_10 = arith.constant 6.250000e-02 : f32
    %18 = vector.broadcast %cst_10 : f32 to vector<32x1xf32>
    %19 = arith.mulf %10, %18 : vector<32x1xf32>
    %cst_11 = arith.constant 6.250000e-02 : f32
    %20 = vector.broadcast %cst_11 : f32 to vector<32x1xf32>
    %21 = arith.mulf %17, %20 : vector<32x1xf32>
    %22 = arith.mulf %19, %19 : vector<32x1xf32>
    %23 = arith.subf %21, %22 : vector<32x1xf32>
    %cst_12 = arith.constant 0.000000e+00 : f32
    %24 = vector.broadcast %cst_12 : f32 to vector<32x1xf32>
    %25 = arith.maximumf %23, %24 : vector<32x1xf32>
    %cst_13 = arith.constant 9.99999974E-6 : f32
    %26 = vector.broadcast %cst_13 : f32 to vector<32x1xf32>
    %27 = arith.addf %25, %26 : vector<32x1xf32>
    %28 = math.rsqrt %27 : vector<32x1xf32>
    %29 = vector.broadcast %19 : vector<32x1xf32> to vector<32x8xf32>
    %30 = arith.subf %2, %29 : vector<32x8xf32>
    %31 = vector.broadcast %28 : vector<32x1xf32> to vector<32x8xf32>
    %32 = arith.mulf %30, %31 : vector<32x8xf32>
    %c0_14 = arith.constant 0 : index
    %c0_15 = arith.constant 0 : index
    %33 = vector.load %arg3[%c0_14, %c0_15] : memref<8x8xf32, #tpu.memory_space<vmem>>, vector<8x8xf32>
    %cst_16 = arith.constant dense<0.000000e+00> : vector<32x8xf32>
    %34 = tpu.matmul %32, %33, %cst_16 {dimension_numbers = #tpu.dot_dimension_numbers<[1], [0], [0], [1], [0, 0, 1, 1], [], []>} : vector<32x8xf32>, vector<8x8xf32>, vector<32x8xf32> -> vector<32x8xf32>
    %35 = vector.broadcast %19 : vector<32x1xf32> to vector<32x8xf32>
    %36 = arith.subf %5, %35 : vector<32x8xf32>
    %37 = vector.broadcast %28 : vector<32x1xf32> to vector<32x8xf32>
    %38 = arith.mulf %36, %37 : vector<32x8xf32>
    %c0_17 = arith.constant 0 : index
    %c0_18 = arith.constant 0 : index
    %39 = vector.load %arg4[%c0_17, %c0_18] : memref<8x8xf32, #tpu.memory_space<vmem>>, vector<8x8xf32>
    %cst_19 = arith.constant dense<0.000000e+00> : vector<32x8xf32>
    %40 = tpu.matmul %38, %39, %cst_19 {dimension_numbers = #tpu.dot_dimension_numbers<[1], [0], [0], [1], [0, 0, 1, 1], [], []>} : vector<32x8xf32>, vector<8x8xf32>, vector<32x8xf32> -> vector<32x8xf32>
    %41 = arith.addf %34, %40 : vector<32x8xf32>
    %c0_20 = arith.constant 0 : index
    %c0_21 = arith.constant 0 : index
    %42 = vector.load %arg5[%c0_20, %c0_21] : memref<1x8xf32, #tpu.memory_space<vmem>>, vector<1x8xf32>
    %43 = vector.broadcast %42 : vector<1x8xf32> to vector<32x8xf32>
    %44 = arith.addf %41, %43 : vector<32x8xf32>
    %c0_22 = arith.constant 0 : index
    %c0_23 = arith.constant 0 : index
    %45 = vector.load %arg6[%c0_22, %c0_23] : memref<32x8xf32, #tpu.memory_space<vmem>>, vector<32x8xf32>
    tpu.vector_store %arg6[%c0_22, %c0_23], %44 {strides = array<i32>} : memref<32x8xf32, #tpu.memory_space<vmem>>, vector<32x8xf32>,
    return
  }
  func.func @transform_0(%arg0: i32) -> (i32, i32, i32, i32) {
    %c0_i32 = arith.constant 0 : i32
    %c0_i32_0 = arith.constant 0 : i32
    %c0_i32_1 = arith.constant 0 : i32
    %c0_i32_2 = arith.constant 0 : i32
    return %arg0, %c0_i32, %c0_i32_0, %c0_i32_1 : i32, i32, i32, i32
  }
  func.func @transform_1(%arg0: i32) -> (i32, i32, i32, i32) {
    %c1_i32 = arith.constant 1 : i32
    %c0_i32 = arith.constant 0 : i32
    %c0_i32_0 = arith.constant 0 : i32
    %c0_i32_1 = arith.constant 0 : i32
    return %arg0, %c1_i32, %c0_i32, %c0_i32_0 : i32, i32, i32, i32
  }
  func.func @transform_2(%arg0: i32) -> (i32, i32) {
    %c0_i32 = arith.constant 0 : i32
    %c0_i32_0 = arith.constant 0 : i32
    %c0_i32_1 = arith.constant 0 : i32
    return %c0_i32, %c0_i32_0 : i32, i32
  }
  func.func @transform_3(%arg0: i32) -> (i32, i32) {
    %c0_i32 = arith.constant 0 : i32
    %c0_i32_0 = arith.constant 0 : i32
    %c0_i32_1 = arith.constant 0 : i32
    return %c0_i32, %c0_i32_0 : i32, i32
  }
  func.func @transform_4(%arg0: i32) -> (i32, i32) {
    %c0_i32 = arith.constant 0 : i32
    %c0_i32_0 = arith.constant 0 : i32
    %c0_i32_1 = arith.constant 0 : i32
    return %c0_i32, %c0_i32_0 : i32, i32
  }
  func.func @transform_5(%arg0: i32) -> (i32, i32) {
    %c0_i32 = arith.constant 0 : i32
    %c0_i32_0 = arith.constant 0 : i32
    return %arg0, %c0_i32 : i32, i32
  }
}

</mosaic_0001>

<llo_original>
// kernel: tpu_custom_call.1
$region0: #{tpu_custom_call.1}
  #allocation0 [shape = 'u32[]', space=smem, size = 0x4, offset = 0x4, fixed_abs, tag = 'smem constant byte address 0x4 - core index']
  #allocation1 [shape = 'u32[144,128]{1,0:T(1,128)}', space=vmem, size = 0x12000, scoped, tag = 'internal scratch']
  %s0 = inlined_call_operand.vmem [shape: f32[16,2,8,8], index: 0, kind: input, shape index: {}]
  %s1 = inlined_call_operand.vmem [shape: f32[16,2,8,8], index: 1, kind: input, shape index: {}]
  %s2 = inlined_call_operand.vmem [shape: f32[8,8], index: 2, kind: input, shape index: {}]
  %s3 = inlined_call_operand.vmem [shape: f32[8,8], index: 3, kind: input, shape index: {}]
  %s4 = inlined_call_operand.vmem [shape: f32[1,8], index: 4, kind: input, shape index: {}]
  %s5 = inlined_call_operand.vmem [shape: f32[128,8], index: 5, kind: output, shape index: {}]
  %s6 = sld [smem:[#allocation0]]
  $region129: #{tpu_custom_call.1} parent=0
    _
  %s8 = ssub.s32 1, %s6
  %s9 = scalar_select 0, %s8, %s6
  $region1: #{tpu_custom_call.1} parent=0
    #allocation2 [shape = 'u8[32768]{0}', space=vmem, size = 0x8000, scoped, tag = 'input window, operand 0']
    #allocation3 [shape = 'u8[32768]{0}', space=vmem, size = 0x8000, scoped, tag = 'input window, operand 1']
    loop: start=0, step=1, limit=6
    $region2: #{tpu_custom_call.1} parent=1 // loop_pre_header
      _
    $region3: #{tpu_custom_call.1} parent=1 // loop_header
      %s11 = sphi 0, %s15
      %p12 = scmp.ge.s32.totalorder %s11, 6
      %s21 = sphi 0, %s23
      %s24 = sphi 0, %s21
      %s25 = sphi 0, %s24
      %s41 = sphi 0, %s25
      %s47 = sphi 0, %s49
      %s50 = sphi 0, %s47
      %s51 = sphi 0, %s50
      %s67 = sphi 0, %s51
      %s71 = sphi 0, %s71
      %s73 = sphi 0, %s71
      %s74 = sphi 0, %s73
      %s88 = sphi 0, %s74
      %s92 = sphi 0, %s92
      %s94 = sphi 0, %s92
      %s95 = sphi 0, %s94
      %s109 = sphi 0, %s95
      %s113 = sphi 0, %s113
      %s115 = sphi 0, %s113
      %s116 = sphi 0, %s115
      %s130 = sphi 0, %s116
      %s136 = sphi 0, %s138
      %s139 = sphi 0, %s136
      %s140 = sphi 0, %s139
      %s156 = sphi 0, %s140
    $region4: #{tpu_custom_call.1} parent=1 // loop_header_branch
      %14 = sbr.rel (%p12) target = $region8
    $region5: #{tpu_custom_call.1} parent=1 // loop_body
      %s16 = ssub.s32 %s11, 1
      %s17 = ssub.s32 %s11, 2
      %s18 = sadd.s32 %s11, 1
      %s19 = ssub.s32 %s11, %s18
      %p20 = scmp.eq.s32.totalorder %s19, 0
      %s22 = sadd.s32 %s21, 1
      %s23 = scalar_select %p20, %s21, %s22
      %p26 = pneg %p20
      %p27 = scmp.eq.s32.totalorder %s11, 3
      %p28 = por %p26, %p27
      %p29 = scmp.ne.s32.totalorder %s21, %s24
      %p30 = scmp.eq.s32.totalorder %s11, 0
      %p31 = por %p29, %p30
      %p32 = scmp.ne.s32.totalorder %s21, %s24
      %p33 = scmp.eq.s32.totalorder %s16, 3
      %p34 = por %p32, %p33
      %p35 = scmp.ne.s32.totalorder %s24, %s25
      %p36 = scmp.eq.s32.totalorder %s16, 0
      %p37 = por %p35, %p36
      %p38 = scmp.ne.s32.totalorder %s24, %s25
      %p39 = scmp.eq.s32.totalorder %s17, 3
      %p40 = por %p38, %p39
      %p42 = scmp.ne.s32.totalorder %s25, %s41
      %p43 = scmp.eq.s32.totalorder %s17, 0
      %p44 = por %p42, %p43
      %s45 = ssub.s32 %s11, %s18
      %p46 = scmp.eq.s32.totalorder %s45, 0
      %s48 = sadd.s32 %s47, 1
      %s49 = scalar_select %p46, %s47, %s48
      %p52 = pneg %p46
      %p53 = scmp.eq.s32.totalorder %s11, 3
      %p54 = por %p52, %p53
      %p55 = scmp.ne.s32.totalorder %s47, %s50
      %p56 = scmp.eq.s32.totalorder %s11, 0
      %p57 = por %p55, %p56
      %p58 = scmp.ne.s32.totalorder %s47, %s50
      %p59 = scmp.eq.s32.totalorder %s16, 3
      %p60 = por %p58, %p59
      %p61 = scmp.ne.s32.totalorder %s50, %s51
      %p62 = scmp.eq.s32.totalorder %s16, 0
      %p63 = por %p61, %p62
      %p64 = scmp.ne.s32.totalorder %s50, %s51
      %p65 = scmp.eq.s32.totalorder %s17, 3
      %p66 = por %p64, %p65
      %p68 = scmp.ne.s32.totalorder %s51, %s67
      %p69 = scmp.eq.s32.totalorder %s17, 0
      %p70 = por %p68, %p69
      %s72 = sadd.s32 %s71, 1
      %p75 = scmp.eq.s32.totalorder %s11, 3
      %p76 = scmp.ne.s32.totalorder %s71, %s73
      %p77 = scmp.eq.s32.totalorder %s11, 0
      %p78 = por %p76, %p77
      %p79 = scmp.ne.s32.totalorder %s71, %s73
      %p80 = scmp.eq.s32.totalorder %s16, 3
      %p81 = por %p79, %p80
      %p82 = scmp.ne.s32.totalorder %s73, %s74
      %p83 = scmp.eq.s32.totalorder %s16, 0
      %p84 = por %p82, %p83
      %p85 = scmp.ne.s32.totalorder %s73, %s74
      %p86 = scmp.eq.s32.totalorder %s17, 3
      %p87 = por %p85, %p86
      %p89 = scmp.ne.s32.totalorder %s74, %s88
      %p90 = scmp.eq.s32.totalorder %s17, 0
      %p91 = por %p89, %p90
      %s93 = sadd.s32 %s92, 1
      %p96 = scmp.eq.s32.totalorder %s11, 3
      %p97 = scmp.ne.s32.totalorder %s92, %s94
      %p98 = scmp.eq.s32.totalorder %s11, 0
      %p99 = por %p97, %p98
      %p100 = scmp.ne.s32.totalorder %s92, %s94
      %p101 = scmp.eq.s32.totalorder %s16, 3
      %p102 = por %p100, %p101
      %p103 = scmp.ne.s32.totalorder %s94, %s95
      %p104 = scmp.eq.s32.totalorder %s16, 0
      %p105 = por %p103, %p104
      %p106 = scmp.ne.s32.totalorder %s94, %s95
      %p107 = scmp.eq.s32.totalorder %s17, 3
      %p108 = por %p106, %p107
      %p110 = scmp.ne.s32.totalorder %s95, %s109
      %p111 = scmp.eq.s32.totalorder %s17, 0
      %p112 = por %p110, %p111
      %s114 = sadd.s32 %s113, 1
      %p117 = scmp.eq.s32.totalorder %s11, 3
      %p118 = scmp.ne.s32.totalorder %s113, %s115
      %p119 = scmp.eq.s32.totalorder %s11, 0
      %p120 = por %p118, %p119
      %p121 = scmp.ne.s32.totalorder %s113, %s115
      %p122 = scmp.eq.s32.totalorder %s16, 3
      %p123 = por %p121, %p122
      %p124 = scmp.ne.s32.totalorder %s115, %s116
      %p125 = scmp.eq.s32.totalorder %s16, 0
      %p126 = por %p124, %p125
      %p127 = scmp.ne.s32.totalorder %s115, %s116
      %p128 = scmp.eq.s32.totalorder %s17, 3
      %p129 = por %p127, %p128
      %p131 = scmp.ne.s32.totalorder %s116, %s130
      %p132 = scmp.eq.s32.totalorder %s17, 0
      %p133 = por %p131, %p132
      %s134 = ssub.s32 %s11, %s18
      %p135 = scmp.eq.s32.totalorder %s134, 0
      %s137 = sadd.s32 %s136, 1
      %s138 = scalar_select %p135, %s136, %s137
      %p141 = pneg %p135
      %p142 = scmp.eq.s32.totalorder %s11, 3
      %p143 = por %p141, %p142
      %p144 = scmp.ne.s32.totalorder %s136, %s139
      %p145 = scmp.eq.s32.totalorder %s11, 0
      %p146 = por %p144, %p145
      %p147 = scmp.ne.s32.totalorder %s136, %s139
      %p148 = scmp.eq.s32.totalorder %s16, 3
      %p149 = por %p147, %p148
      %p150 = scmp.ne.s32.totalorder %s139, %s140
      %p151 = scmp.eq.s32.totalorder %s16, 0
      %p152 = por %p150, %p151
      %p153 = scmp.ne.s32.totalorder %s139, %s140
      %p154 = scmp.eq.s32.totalorder %s17, 3
      %p155 = por %p153, %p154
      %p157 = scmp.ne.s32.totalorder %s140, %s156
      %p158 = scmp.eq.s32.totalorder %s17, 0
      %p159 = por %p157, %p158
      %p160 = scmp.le.s32.totalorder 1, %s11
      %p161 = scmp.lt.s32.totalorder %s11, 5
      %p162 = pnand %p160, %p161
      %p163 = pneg %p162
      // Predicated region
      $region9: #{tpu_custom_call.1} parent=5 // pred_check
        _
      $region10: #{tpu_custom_call.1} parent=5 // pred_check_branch
        %165 = sbr.rel (%p162) target = $region12
      $region11: #{tpu_custom_call.1} parent=5 // pred_region
        %s166 = ssub.s32 %s11, 1
        // Predicated region
        $region13: #{tpu_custom_call.1} parent=11 // pred_check
          %p167 = pneg %p84
        $region14: #{tpu_custom_call.1} parent=11 // pred_check_branch
          %169 = sbr.rel (%p167) target = $region16
        $region15: #{tpu_custom_call.1} parent=11 // pred_region
          _
        $region16: #{tpu_custom_call.1} parent=11 // pred_fallthru
          _
        // Predicated region
        $region17: #{tpu_custom_call.1} parent=11 // pred_check
          %p170 = pneg %p105
        $region18: #{tpu_custom_call.1} parent=11 // pred_check_branch
          %172 = sbr.rel (%p170) target = $region20
        $region19: #{tpu_custom_call.1} parent=11 // pred_region
          _
        $region20: #{tpu_custom_call.1} parent=11 // pred_fallthru
          _
        // Predicated region
        $region21: #{tpu_custom_call.1} parent=11 // pred_check
          %p173 = pneg %p126
        $region22: #{tpu_custom_call.1} parent=11 // pred_check_branch
          %175 = sbr.rel (%p173) target = $region24
        $region23: #{tpu_custom_call.1} parent=11 // pred_region
          _
        $region24: #{tpu_custom_call.1} parent=11 // pred_fallthru
          _
      $region12: #{tpu_custom_call.1} parent=5 // pred_fallthru
        _
      %p176 = scmp.lt.s32.totalorder %s11, 4
      // Predicated region
      $region25: #{tpu_custom_call.1} parent=5 // pred_check
        %p177 = pneg %p176
      $region26: #{tpu_custom_call.1} parent=5 // pred_check_branch
        %179 = sbr.rel (%p177) target = $region28
      $region27: #{tpu_custom_call.1} parent=5 // pred_region
        // Predicated region
        $region29: #{tpu_custom_call.1} parent=27 // pred_check
          %p180 = pneg %p31
        $region30: #{tpu_custom_call.1} parent=27 // pred_check_branch
          %182 = sbr.rel (%p180) target = $region32
        $region31: #{tpu_custom_call.1} parent=27 // pred_region
          %s183 = sand.u32 %s21, 1
          %s184 = sand.u32 %s21, 1
          %s185 = smul.addr %s184, 32
          %s186 = scalar_lea.vmem [#allocation2], %s185
          %s187 = smul.u32 4, %s11
          %s188 = smul.addr %s187, 2
          %s189 = smul.addr %s188, 8
          %s190 = scalar_lea.vmem %s0, %s189
          // Predicated region
          $region33: #{tpu_custom_call.1} parent=31 // pred_check
            _
          $region34: #{tpu_custom_call.1} parent=31 // pred_check_branch
            %192 = sbr.rel (0) target = $region36
          $region35: #{tpu_custom_call.1} parent=31 // pred_region
            // Predicated region
            $region37: #{tpu_custom_call.1} parent=35 // pred_check
              _
            $region38: #{tpu_custom_call.1} parent=35 // pred_check_branch
              %194 = sbr.rel (0) target = $region40
            $region39: #{tpu_custom_call.1} parent=35 // pred_region
              // Predicated region
              $region52: #{tpu_custom_call.1} parent=39 // pred_check
                _
              $region53: #{tpu_custom_call.1} parent=39 // pred_check_branch
                %216 = sbr.rel (0) target = $region55
              $region54: #{tpu_custom_call.1} parent=39 // pred_region
                loop: start=0, step=1, limit=1
                $region56: #{tpu_custom_call.1} parent=54 // loop_pre_header
                  _
                $region57: #{tpu_custom_call.1} parent=54 // loop_header
                  %s218 = sphi 0, %s222
                  %p219 = scmp.ge.s32.totalorder %s218, 1
                  %s223 = sphi %s190, %s190
                  %s224 = sphi %s186, %s186
                $region58: #{tpu_custom_call.1} parent=54 // loop_header_branch
                  %221 = sbr.rel (%p219) target = $region62
                $region59: #{tpu_custom_call.1} parent=54 // loop_body
                  %v225 = vld [vmem:[%s223] sm:$0xff]
                  %226 = vst [vmem:[%s224] sm:$0xff] %v225
                  %v227 = vld [vmem:[%s223 + $0x10] sm:$0xff]
                  %228 = vst [vmem:[%s224 + $0x8] sm:$0xff] %v227
                  %v229 = vld [vmem:[%s223 + $0x20] sm:$0xff]
                  %230 = vst [vmem:[%s224 + $0x10] sm:$0xff] %v229
                  %v231 = vld [vmem:[%s223 + $0x30] sm:$0xff]
                  %232 = vst [vmem:[%s224 + $0x18] sm:$0xff] %v231
                $region60: #{tpu_custom_call.1} parent=54 // loop_footer
                  %s222 = sadd.s32 1, %s218
                $region61: #{tpu_custom_call.1} parent=54 // loop_footer_branch
                  %217 = sbr.rel target = $region57
                $region62: #{tpu_custom_call.1} parent=54 // loop_exit
                  _
              $region55: #{tpu_custom_call.1} parent=39 // pred_fallthru
                _
              // Predicated region
              $region63: #{tpu_custom_call.1} parent=39 // pred_check
                _
              $region64: #{tpu_custom_call.1} parent=39 // pred_check_branch
                %234 = sbr.rel target = $region66
              $region65: #{tpu_custom_call.1} parent=39 // pred_region
                _
              $region66: #{tpu_custom_call.1} parent=39 // pred_fallthru
                _
            $region40: #{tpu_custom_call.1} parent=35 // pred_fallthru
              _
            // Predicated region
            $region41: #{tpu_custom_call.1} parent=35 // pred_check
              _
            $region42: #{tpu_custom_call.1} parent=35 // pred_check_branch
              %196 = sbr.rel target = $region44
            $region43: #{tpu_custom_call.1} parent=35 // pred_region
              %s198 = ssub.s32 256, 1
              loop: start=0, step=1, limit=1
              $region45: #{tpu_custom_call.1} parent=43 // loop_pre_header
                _
              $region46: #{tpu_custom_call.1} parent=43 // loop_header
                %s200 = sphi 0, %s204
                %p201 = scmp.ge.s32.totalorder %s200, 1
                %s205 = sphi %s190, %s190
                %s206 = sphi %s186, %s186
              $region47: #{tpu_custom_call.1} parent=43 // loop_header_branch
                %203 = sbr.rel (%p201) target = $region51
              $region48: #{tpu_custom_call.1} parent=43 // loop_body
                %v207 = vld [vmem:[%s205] sm:%s198]
                %208 = vst [vmem:[%s206] sm:%s198] %v207
                %v209 = vld [vmem:[%s205 + $0x10] sm:%s198]
                %210 = vst [vmem:[%s206 + $0x8] sm:%s198] %v209
                %v211 = vld [vmem:[%s205 + $0x20] sm:%s198]
                %212 = vst [vmem:[%s206 + $0x10] sm:%s198] %v211
                %v213 = vld [vmem:[%s205 + $0x30] sm:%s198]
                %214 = vst [vmem:[%s206 + $0x18] sm:%s198] %v213
              $region49: #{tpu_custom_call.1} parent=43 // loop_footer
                %s204 = sadd.s32 1, %s200
              $region50: #{tpu_custom_call.1} parent=43 // loop_footer_branch
                %199 = sbr.rel target = $region46
              $region51: #{tpu_custom_call.1} parent=43 // loop_exit
                _
            $region44: #{tpu_custom_call.1} parent=35 // pred_fallthru
              _
          $region36: #{tpu_custom_call.1} parent=31 // pred_fallthru
            _
          %235 = vnop
        $region32: #{tpu_custom_call.1} parent=27 // pred_fallthru
          _
        // Predicated region
        $region67: #{tpu_custom_call.1} parent=27 // pred_check
          %p236 = pneg %p57
        $region68: #{tpu_custom_call.1} parent=27 // pred_check_branch
          %238 = sbr.rel (%p236) target = $region70
        $region69: #{tpu_custom_call.1} parent=27 // pred_region
          %s239 = sand.u32 %s47, 1
          %s240 = sand.u32 %s47, 1
          %s241 = smul.addr %s240, 32
          %s242 = scalar_lea.vmem [#allocation3], %s241
          %s243 = smul.u32 4, %s11
          %s244 = smul.addr %s243, 2
          %s245 = sadd.s32 1, %s244
          %s246 = smul.addr %s245, 8
          %s247 = scalar_lea.vmem %s1, %s246
          // Predicated region
          $region71: #{tpu_custom_call.1} parent=69 // pred_check
            _
          $region72: #{tpu_custom_call.1} parent=69 // pred_check_branch
            %249 = sbr.rel (0) target = $region74
          $region73: #{tpu_custom_call.1} parent=69 // pred_region
            // Predicated region
            $region75: #{tpu_custom_call.1} parent=73 // pred_check
              _
            $region76: #{tpu_custom_call.1} parent=73 // pred_check_branch
              %251 = sbr.rel (0) target = $region78
            $region77: #{tpu_custom_call.1} parent=73 // pred_region
              // Predicated region
              $region90: #{tpu_custom_call.1} parent=77 // pred_check
                _
              $region91: #{tpu_custom_call.1} parent=77 // pred_check_branch
                %273 = sbr.rel (0) target = $region93
              $region92: #{tpu_custom_call.1} parent=77 // pred_region
                loop: start=0, step=1, limit=1
                $region94: #{tpu_custom_call.1} parent=92 // loop_pre_header
                  _
                $region95: #{tpu_custom_call.1} parent=92 // loop_header
                  %s275 = sphi 0, %s279
                  %p276 = scmp.ge.s32.totalorder %s275, 1
                  %s280 = sphi %s247, %s247
                  %s281 = sphi %s242, %s242
                $region96: #{tpu_custom_call.1} parent=92 // loop_header_branch
                  %278 = sbr.rel (%p276) target = $region100
                $region97: #{tpu_custom_call.1} parent=92 // loop_body
                  %v282 = vld [vmem:[%s280] sm:$0xff]
                  %283 = vst [vmem:[%s281] sm:$0xff] %v282
                  %v284 = vld [vmem:[%s280 + $0x10] sm:$0xff]
                  %285 = vst [vmem:[%s281 + $0x8] sm:$0xff] %v284
                  %v286 = vld [vmem:[%s280 + $0x20] sm:$0xff]
                  %287 = vst [vmem:[%s281 + $0x10] sm:$0xff] %v286
                  %v288 = vld [vmem:[%s280 + $0x30] sm:$0xff]
                  %289 = vst [vmem:[%s281 + $0x18] sm:$0xff] %v288
                $region98: #{tpu_custom_call.1} parent=92 // loop_footer
                  %s279 = sadd.s32 1, %s275
                $region99: #{tpu_custom_call.1} parent=92 // loop_footer_branch
                  %274 = sbr.rel target = $region95
                $region100: #{tpu_custom_call.1} parent=92 // loop_exit
                  _
              $region93: #{tpu_custom_call.1} parent=77 // pred_fallthru
                _
              // Predicated region
              $region101: #{tpu_custom_call.1} parent=77 // pred_check
                _
              $region102: #{tpu_custom_call.1} parent=77 // pred_check_branch
                %291 = sbr.rel target = $region104
              $region103: #{tpu_custom_call.1} parent=77 // pred_region
                _
              $region104: #{tpu_custom_call.1} parent=77 // pred_fallthru
                _
            $region78: #{tpu_custom_call.1} parent=73 // pred_fallthru
              _
            // Predicated region
            $region79: #{tpu_custom_call.1} parent=73 // pred_check
              _
            $region80: #{tpu_custom_call.1} parent=73 // pred_check_branch
              %253 = sbr.rel target = $region82
            $region81: #{tpu_custom_call.1} parent=73 // pred_region
              %s255 = ssub.s32 256, 1
              loop: start=0, step=1, limit=1
              $region83: #{tpu_custom_call.1} parent=81 // loop_pre_header
                _
              $region84: #{tpu_custom_call.1} parent=81 // loop_header
                %s257 = sphi 0, %s261
                %p258 = scmp.ge.s32.totalorder %s257, 1
                %s262 = sphi %s247, %s247
                %s263 = sphi %s242, %s242
              $region85: #{tpu_custom_call.1} parent=81 // loop_header_branch
                %260 = sbr.rel (%p258) target = $region89
              $region86: #{tpu_custom_call.1} parent=81 // loop_body
                %v264 = vld [vmem:[%s262] sm:%s255]
                %265 = vst [vmem:[%s263] sm:%s255] %v264
                %v266 = vld [vmem:[%s262 + $0x10] sm:%s255]
                %267 = vst [vmem:[%s263 + $0x8] sm:%s255] %v266
                %v268 = vld [vmem:[%s262 + $0x20] sm:%s255]
                %269 = vst [vmem:[%s263 + $0x10] sm:%s255] %v268
                %v270 = vld [vmem:[%s262 + $0x30] sm:%s255]
                %271 = vst [vmem:[%s263 + $0x18] sm:%s255] %v270
              $region87: #{tpu_custom_call.1} parent=81 // loop_footer
                %s261 = sadd.s32 1, %s257
              $region88: #{tpu_custom_call.1} parent=81 // loop_footer_branch
                %256 = sbr.rel target = $region84
              $region89: #{tpu_custom_call.1} parent=81 // loop_exit
                _
            $region82: #{tpu_custom_call.1} parent=73 // pred_fallthru
              _
          $region74: #{tpu_custom_call.1} parent=69 // pred_fallthru
            _
          %292 = vnop
        $region70: #{tpu_custom_call.1} parent=27 // pred_fallthru
          _
      $region28: #{tpu_custom_call.1} parent=5 // pred_fallthru
        _
      %p293 = scmp.le.s32.totalorder 1, %s11
      %p294 = scmp.lt.s32.totalorder %s11, 5
      %p295 = pnand %p293, %p294
      %p296 = pneg %p295
      // Predicated region
      $region105: #{tpu_custom_call.1} parent=5 // pred_check
        _
      $region106: #{tpu_custom_call.1} parent=5 // pred_check_branch
        %298 = sbr.rel (%p295) target = $region108
      $region107: #{tpu_custom_call.1} parent=5 // pred_region
        %s299 = ssub.s32 %s11, 1
        %s300 = sand.u32 %s24, 1
        %s301 = sand.u32 %s24, 1
        %s302 = smul.addr %s301, 32
        %s303 = scalar_lea.vmem [#allocation2], %s302
        // Predicated region
        $region109: #{tpu_custom_call.1} parent=107 // pred_check
          %p304 = pneg %p37
        $region110: #{tpu_custom_call.1} parent=107 // pred_check_branch
          %306 = sbr.rel (%p304) target = $region112
        $region111: #{tpu_custom_call.1} parent=107 // pred_region
          _
        $region112: #{tpu_custom_call.1} parent=107 // pred_fallthru
          _
        %s307 = sand.u32 %s50, 1
        %s308 = sand.u32 %s50, 1
        %s309 = smul.addr %s308, 32
        %s310 = scalar_lea.vmem [#allocation3], %s309
        // Predicated region
        $region113: #{tpu_custom_call.1} parent=107 // pred_check
          %p311 = pneg %p63
        $region114: #{tpu_custom_call.1} parent=107 // pred_check_branch
          %313 = sbr.rel (%p311) target = $region116
        $region115: #{tpu_custom_call.1} parent=107 // pred_region
          _
        $region116: #{tpu_custom_call.1} parent=107 // pred_fallthru
          _
        %s314 = sand.u32 %s24, 1
        %s315 = sand.u32 %s24, 1
        %s316 = smul.addr %s315, 32
        %s317 = scalar_lea.vmem [#allocation2], %s316
        %p318 = pneg %p37
        %p319 = pneg %p34
        %s320 = sand.u32 %s50, 1
        %s321 = sand.u32 %s50, 1
        %s322 = smul.addr %s321, 32
        %s323 = scalar_lea.vmem [#allocation3], %s322
        %p324 = pneg %p63
        %p325 = pneg %p60
        %p326 = pneg %p84
        %p327 = pneg %p81
        %p328 = pneg %p105
        %p329 = pneg %p102
        %p330 = pneg %p126
        %p331 = pneg %p123
        %p332 = pneg %p152
        %p333 = pneg %p149
        %s334 = smul.u32 4, %s16
        %p335 = scmp.lt.s32.totalorder %s334, 15
        %s336 = scalar_select %p335, %s334, 15
        %s337 = smul.addr %s336, 8
        %s338 = scalar_lea.vmem %s5, %s337
        %s339 = smul.u32 4, %s16
        %s340 = smul.u32 4, %s16
        %s341 = smul.u32 4, %s16
        %p342 = scmp.lt.s32.totalorder %s341, 15
        %s343 = scalar_select %p342, %s341, 15
        %s344 = smul.addr %s343, 8
        %s345 = scalar_lea.vmem %s5, %s344
        %s346 = smul.u32 4, %s16
        %v347 = vld [vmem:[%s303] sm:$0xff]
        %v348 = vld [vmem:[%s303 + $0x8] sm:$0xff]
        %v349 = vld [vmem:[%s303 + $0x10] sm:$0xff]
        %v350 = vld [vmem:[%s303 + $0x18] sm:$0xff]
        %v351 = vld [vmem:[%s310] sm:$0xff]
        %v352 = vld [vmem:[%s310 + $0x8] sm:$0xff]
        %v353 = vld [vmem:[%s310 + $0x10] sm:$0xff]
        %v354 = vld [vmem:[%s310 + $0x18] sm:$0xff]
        %vm355 = vcmask 64512
        %v356 = vsel %vm355, %v347, 0.0
        %357 = vadd.xlane.f32.xlu0 %v356
        %v358 = vpop.xlane.xlu0 %357
        %v359 = vsel %vm355, %v348, 0.0
        %360 = vadd.xlane.f32.xlu0 %v359
        %v361 = vpop.xlane.xlu0 %360
        %v362 = vsel %vm355, %v349, 0.0
        %363 = vadd.xlane.f32.xlu0 %v362
        %v364 = vpop.xlane.xlu0 %363
        %v365 = vsel %vm355, %v350, 0.0
        %366 = vadd.xlane.f32.xlu0 %v365
        %v367 = vpop.xlane.xlu0 %366
        %v368 = vsel %vm355, %v351, 0.0
        %369 = vadd.xlane.f32.xlu0 %v368
        %v370 = vpop.xlane.xlu0 %369
        %v371 = vsel %vm355, %v352, 0.0
        %372 = vadd.xlane.f32.xlu0 %v371
        %v373 = vpop.xlane.xlu0 %372
        %v374 = vsel %vm355, %v353, 0.0
        %375 = vadd.xlane.f32.xlu0 %v374
        %v376 = vpop.xlane.xlu0 %375
        %v377 = vsel %vm355, %v354, 0.0
        %378 = vadd.xlane.f32.xlu0 %v377
        %v379 = vpop.xlane.xlu0 %378
        %v380 = vadd.f32 %v358, %v370
        %v381 = vadd.f32 %v361, %v373
        %v382 = vadd.f32 %v364, %v376
        %v383 = vadd.f32 %v367, %v379
        %v384 = vmul.f32 %v347, %v347
        %v385 = vmul.f32 %v348, %v348
        %v386 = vmul.f32 %v349, %v349
        %v387 = vmul.f32 %v350, %v350
        %v388 = vsel %vm355, %v384, 0.0
        %389 = vadd.xlane.f32.xlu0 %v388
        %v390 = vpop.xlane.xlu0 %389
        %v391 = vsel %vm355, %v385, 0.0
        %392 = vadd.xlane.f32.xlu0 %v391
        %v393 = vpop.xlane.xlu0 %392
        %v394 = vsel %vm355, %v386, 0.0
        %395 = vadd.xlane.f32.xlu0 %v394
        %v396 = vpop.xlane.xlu0 %395
        %v397 = vsel %vm355, %v387, 0.0
        %398 = vadd.xlane.f32.xlu0 %v397
        %v399 = vpop.xlane.xlu0 %398
        %v400 = vmul.f32 %v351, %v351
        %v401 = vmul.f32 %v352, %v352
        %v402 = vmul.f32 %v353, %v353
        %v403 = vmul.f32 %v354, %v354
        %v404 = vsel %vm355, %v400, 0.0
        %405 = vadd.xlane.f32.xlu0 %v404
        %v406 = vpop.xlane.xlu0 %405
        %v407 = vsel %vm355, %v401, 0.0
        %408 = vadd.xlane.f32.xlu0 %v407
        %v409 = vpop.xlane.xlu0 %408
        %v410 = vsel %vm355, %v402, 0.0
        %411 = vadd.xlane.f32.xlu0 %v410
        %v412 = vpop.xlane.xlu0 %411
        %v413 = vsel %vm355, %v403, 0.0
        %414 = vadd.xlane.f32.xlu0 %v413
        %v415 = vpop.xlane.xlu0 %414
        %v416 = vadd.f32 %v390, %v406
        %v417 = vadd.f32 %v393, %v409
        %v418 = vadd.f32 %v396, %v412
        %v419 = vadd.f32 %v399, %v415
        %v420 = vmul.f32 %v380, 0.0625
        %v421 = vmul.f32 %v381, 0.0625
        %v422 = vmul.f32 %v382, 0.0625
        %v423 = vmul.f32 %v383, 0.0625
        %v424 = vmul.f32 %v416, 0.0625
        %v425 = vmul.f32 %v417, 0.0625
        %v426 = vmul.f32 %v418, 0.0625
        %v427 = vmul.f32 %v419, 0.0625
        %v428 = vmul.f32 %v420, %v420
        %v429 = vmul.f32 %v421, %v421
        %v430 = vmul.f32 %v422, %v422
        %v431 = vmul.f32 %v423, %v423
        %v432 = vsub.f32 %v424, %v428
        %v433 = vsub.f32 %v425, %v429
        %v434 = vsub.f32 %v426, %v430
        %v435 = vsub.f32 %v427, %v431
        %v436 = vmax.f32 %v432, 0.0
        %v437 = vmax.f32 %v433, 0.0
        %v438 = vmax.f32 %v434, 0.0
        %v439 = vmax.f32 %v435, 0.0
        %v440 = vadd.f32 %v436, 1e-05
        %v441 = vadd.f32 %v437, 1e-05
        %v442 = vadd.f32 %v438, 1e-05
        %v443 = vadd.f32 %v439, 1e-05
        %v444 = vrsqrt.pop %v440
        %v445 = vrsqrt.pop %v441
        %v446 = vrsqrt.pop %v442
        %v447 = vrsqrt.pop %v443
        %v448 = vsub.f32 %v347, %v420
        %v449 = vsub.f32 %v348, %v421
        %v450 = vsub.f32 %v349, %v422
        %v451 = vsub.f32 %v350, %v423
        %v452 = vmul.f32 %v448, %v444
        %v453 = vmul.f32 %v449, %v445
        %v454 = vmul.f32 %v450, %v446
        %v455 = vmul.f32 %v451, %v447
        %v456 = vld [vmem:[%s2] sm:$0xff]
        %v457 = vsub.f32 %v351, %v420
        %v458 = vsub.f32 %v352, %v421
        %v459 = vsub.f32 %v353, %v422
        %v460 = vsub.f32 %v354, %v423
        %v461 = vmul.f32 %v457, %v444
        %v462 = vmul.f32 %v458, %v445
        %v463 = vmul.f32 %v459, %v446
        %v464 = vmul.f32 %v460, %v447
        %v465 = vld [vmem:[%s3] sm:$0xff]
        %v467 = vsel %vm355, %v461, 0
        %v470 = vsel %vm355, %v462, 0
        %v473 = vsel %vm355, %v463, 0
        %v476 = vsel %vm355, %v464, 0
        %478 = vmatprep.subr.mxu0 0.0
        %479 = vmatpush1.msra.mxu0 0.0
        %480 = vmatprep.subr.mxu0 0.0
        %481 = vmatpush1.msra.mxu0 0.0
        %482 = vmatprep.subr.mxu0 0.0
        %483 = vmatpush1.msra.mxu0 0.0
        %484 = vmatprep.subr.mxu0 0.0
        %485 = vmatpush1.msra.mxu0 0.0
        %486 = vmatprep.subr.mxu0 0.0
        %487 = vmatpush1.msra.mxu0 0.0
        %488 = vmatprep.subr.mxu0 0.0
        %489 = vmatpush1.msra.mxu0 0.0
        %490 = vmatprep.subr.mxu0 0.0
        %491 = vmatpush1.msra.mxu0 0.0
        %492 = vmatprep.subr.mxu0 0.0
        %493 = vmatpush1.msra.mxu0 0.0
        %494 = vmatprep.subr.mxu0 0.0
        %495 = vmatpush1.msra.mxu0 0.0
        %496 = vmatprep.subr.mxu0 0.0
        %497 = vmatpush1.msra.mxu0 0.0
        %498 = vmatprep.subr.mxu0 0.0
        %499 = vmatpush1.msra.mxu0 0.0
        %500 = vmatprep.subr.mxu0 0.0
        %501 = vmatpush1.msra.mxu0 0.0
        %502 = vmatprep.subr.mxu0 0.0
        %503 = vmatpush1.msra.mxu0 0.0
        %504 = vmatprep.subr.mxu0 0.0
        %505 = vmatpush1.msra.mxu0 0.0
        %506 = vmatprep.subr.mxu0 0.0
        %507 = vmatpush1.msra.mxu0 0.0
        %508 = vmatprep.subr.mxu0 0.0
        %509 = vmatpush1.msra.mxu0 %v465
        %510 = vmatprep.subr.mxu0 0.0
        %511 = vmatpush2.msra.mxu0 0.0
        %512 = vmatprep.subr.mxu0 0.0
        %513 = vmatpush2.msra.mxu0 0.0
        %514 = vmatprep.subr.mxu0 0.0
        %515 = vmatpush2.msra.mxu0 0.0
        %516 = vmatprep.subr.mxu0 0.0
        %517 = vmatpush2.msra.mxu0 0.0
        %518 = vmatprep.subr.mxu0 0.0
        %519 = vmatpush2.msra.mxu0 0.0
        %520 = vmatprep.subr.mxu0 0.0
        %521 = vmatpush2.msra.mxu0 0.0
        %522 = vmatprep.subr.mxu0 0.0
        %523 = vmatpush2.msra.mxu0 0.0
        %524 = vmatprep.subr.mxu0 0.0
        %525 = vmatpush2.msra.mxu0 0.0
        %526 = vmatprep.subr.mxu0 0.0
        %527 = vmatpush2.msra.mxu0 0.0
        %528 = vmatprep.subr.mxu0 0.0
        %529 = vmatpush2.msra.mxu0 0.0
        %530 = vmatprep.subr.mxu0 0.0
        %531 = vmatpush2.msra.mxu0 0.0
        %532 = vmatprep.subr.mxu0 0.0
        %533 = vmatpush2.msra.mxu0 0.0
        %534 = vmatprep.subr.mxu0 0.0
        %535 = vmatpush2.msra.mxu0 0.0
        %536 = vmatprep.subr.mxu0 0.0
        %537 = vmatpush2.msra.mxu0 0.0
        %538 = vmatprep.subr.mxu0 0.0
        %539 = vmatpush2.msra.mxu0 0.0
        %540 = vmatprep.subr.mxu0 0.0
        %541 = vmatpush2.msra.mxu0 0.0
        %542 = vmatprep.mubr.f32.mxu0 0.0
        %543 = vmatmul.mubr.f32.gmra.mxu0 %v467
        %v544 = vpop.f32.mrf.mxu0
        %v545 = vadd.f32 0.0, %v544
        %v546 = vpop.f32.mrf.mxu0
        %547 = vmatprep.mubr.f32.mxu0 0.0
        %548 = vmatmul.mubr.f32.gmra.mxu0 %v470
        %v549 = vpop.f32.mrf.mxu0
        %v550 = vadd.f32 0.0, %v549
        %v551 = vpop.f32.mrf.mxu0
        %552 = vmatprep.mubr.f32.mxu0 0.0
        %553 = vmatmul.mubr.f32.gmra.mxu0 %v473
        %v554 = vpop.f32.mrf.mxu0
        %v555 = vadd.f32 0.0, %v554
        %v556 = vpop.f32.mrf.mxu0
        %557 = vmatprep.mubr.f32.mxu0 0.0
        %558 = vmatmul.mubr.f32.gmra.mxu0 %v476
        %v559 = vpop.f32.mrf.mxu0
        %v560 = vadd.f32 0.0, %v559
        %v561 = vpop.f32.mrf.mxu0
        %562 = vdwg.mxu0
        %v564 = vsel %vm355, %v452, 0
        %v567 = vsel %vm355, %v453, 0
        %v570 = vsel %vm355, %v454, 0
        %v573 = vsel %vm355, %v455, 0
        %575 = vmatprep.subr.mxu0 0.0
        %576 = vmatpush1.msra.mxu0 0.0
        %577 = vmatprep.subr.mxu0 0.0
        %578 = vmatpush1.msra.mxu0 0.0
        %579 = vmatprep.subr.mxu0 0.0
        %580 = vmatpush1.msra.mxu0 0.0
        %581 = vmatprep.subr.mxu0 0.0
        %582 = vmatpush1.msra.mxu0 0.0
        %583 = vmatprep.subr.mxu0 0.0
        %584 = vmatpush1.msra.mxu0 0.0
        %585 = vmatprep.subr.mxu0 0.0
        %586 = vmatpush1.msra.mxu0 0.0
        %587 = vmatprep.subr.mxu0 0.0
        %588 = vmatpush1.msra.mxu0 0.0
        %589 = vmatprep.subr.mxu0 0.0
        %590 = vmatpush1.msra.mxu0 0.0
        %591 = vmatprep.subr.mxu0 0.0
        %592 = vmatpush1.msra.mxu0 0.0
        %593 = vmatprep.subr.mxu0 0.0
        %594 = vmatpush1.msra.mxu0 0.0
        %595 = vmatprep.subr.mxu0 0.0
        %596 = vmatpush1.msra.mxu0 0.0
        %597 = vmatprep.subr.mxu0 0.0
        %598 = vmatpush1.msra.mxu0 0.0
        %599 = vmatprep.subr.mxu0 0.0
        %600 = vmatpush1.msra.mxu0 0.0
        %601 = vmatprep.subr.mxu0 0.0
        %602 = vmatpush1.msra.mxu0 0.0
        %603 = vmatprep.subr.mxu0 0.0
        %604 = vmatpush1.msra.mxu0 0.0
        %605 = vmatprep.subr.mxu0 0.0
        %606 = vmatpush1.msra.mxu0 %v456
        %607 = vmatprep.subr.mxu0 0.0
        %608 = vmatpush2.msra.mxu0 0.0
        %609 = vmatprep.subr.mxu0 0.0
        %610 = vmatpush2.msra.mxu0 0.0
        %611 = vmatprep.subr.mxu0 0.0
        %612 = vmatpush2.msra.mxu0 0.0
        %613 = vmatprep.subr.mxu0 0.0
        %614 = vmatpush2.msra.mxu0 0.0
        %615 = vmatprep.subr.mxu0 0.0
        %616 = vmatpush2.msra.mxu0 0.0
        %617 = vmatprep.subr.mxu0 0.0
        %618 = vmatpush2.msra.mxu0 0.0
        %619 = vmatprep.subr.mxu0 0.0
        %620 = vmatpush2.msra.mxu0 0.0
        %621 = vmatprep.subr.mxu0 0.0
        %622 = vmatpush2.msra.mxu0 0.0
        %623 = vmatprep.subr.mxu0 0.0
        %624 = vmatpush2.msra.mxu0 0.0
        %625 = vmatprep.subr.mxu0 0.0
        %626 = vmatpush2.msra.mxu0 0.0
        %627 = vmatprep.subr.mxu0 0.0
        %628 = vmatpush2.msra.mxu0 0.0
        %629 = vmatprep.subr.mxu0 0.0
        %630 = vmatpush2.msra.mxu0 0.0
        %631 = vmatprep.subr.mxu0 0.0
        %632 = vmatpush2.msra.mxu0 0.0
        %633 = vmatprep.subr.mxu0 0.0
        %634 = vmatpush2.msra.mxu0 0.0
        %635 = vmatprep.subr.mxu0 0.0
        %636 = vmatpush2.msra.mxu0 0.0
        %637 = vmatprep.subr.mxu0 0.0
        %638 = vmatpush2.msra.mxu0 0.0
        %639 = vmatprep.mubr.f32.mxu0 0.0
        %640 = vmatmul.mubr.f32.gmra.mxu0 %v564
        %v641 = vpop.f32.mrf.mxu0
        %v642 = vadd.f32 %v545, %v641
        %v643 = vpop.f32.mrf.mxu0
        %644 = vmatprep.mubr.f32.mxu0 0.0
        %645 = vmatmul.mubr.f32.gmra.mxu0 %v567
        %v646 = vpop.f32.mrf.mxu0
        %v647 = vadd.f32 %v550, %v646
        %v648 = vpop.f32.mrf.mxu0
        %649 = vmatprep.mubr.f32.mxu0 0.0
        %650 = vmatmul.mubr.f32.gmra.mxu0 %v570
        %v651 = vpop.f32.mrf.mxu0
        %v652 = vadd.f32 %v555, %v651
        %v653 = vpop.f32.mrf.mxu0
        %654 = vmatprep.mubr.f32.mxu0 0.0
        %655 = vmatmul.mubr.f32.gmra.mxu0 %v573
        %v656 = vpop.f32.mrf.mxu0
        %v657 = vadd.f32 %v560, %v656
        %v658 = vpop.f32.mrf.mxu0
        %659 = vdwg.mxu0
        %v660 = vld [vmem:[%s4] sm:$0x1]
        %v662 = vlaneseq
        %v663 = vshrl.u32 %v662, 7
        %v664 = vsub.s32 0, %v663
        %v665 = vrot.slane %v660, %v664
        %v667 = vadd.f32 %v642, %v665
        %v668 = vadd.f32 %v647, %v665
        %v669 = vadd.f32 %v652, %v665
        %v670 = vadd.f32 %v657, %v665
        %671 = vst.msk [vmem:[%s345] sm:$0xff] %vm355, %v667
        %672 = vst.msk [vmem:[%s345 + $0x8] sm:$0xff] %vm355, %v668
        %673 = vst.msk [vmem:[%s345 + $0x10] sm:$0xff] %vm355, %v669
        %674 = vst.msk [vmem:[%s345 + $0x18] sm:$0xff] %vm355, %v670
        %s675 = smul.u32 4, %s16
        %p676 = scmp.lt.s32.totalorder %s675, 15
        %s677 = scalar_select %p676, %s675, 15
        %s678 = smul.addr %s677, 8
        %s679 = scalar_lea.vmem %s5, %s678
        // Predicated region
        $region117: #{tpu_custom_call.1} parent=107 // pred_check
          %p680 = pneg %p149
        $region118: #{tpu_custom_call.1} parent=107 // pred_check_branch
          %682 = sbr.rel (%p680) target = $region120
        $region119: #{tpu_custom_call.1} parent=107 // pred_region
          %s683 = smul.u32 4, %s16
        $region120: #{tpu_custom_call.1} parent=107 // pred_fallthru
          _
      $region108: #{tpu_custom_call.1} parent=5 // pred_fallthru
        _
      %p684 = scmp.le.s32.totalorder 2, %s11
      // Predicated region
      $region121: #{tpu_custom_call.1} parent=5 // pred_check
        %p685 = pneg %p684
      $region122: #{tpu_custom_call.1} parent=5 // pred_check_branch
        %687 = sbr.rel (%p685) target = $region124
      $region123: #{tpu_custom_call.1} parent=5 // pred_region
        %s688 = ssub.s32 %s11, 2
        // Predicated region
        $region125: #{tpu_custom_call.1} parent=123 // pred_check
          %p689 = pneg %p155
        $region126: #{tpu_custom_call.1} parent=123 // pred_check_branch
          %691 = sbr.rel (%p689) target = $region128
        $region127: #{tpu_custom_call.1} parent=123 // pred_region
          %s692 = smul.u32 4, %s17
          %p693 = scmp.lt.s32.totalorder %s692, 15
          %s694 = scalar_select %p693, %s692, 15
          %s695 = smul.addr %s694, 8
          %s696 = scalar_lea.vmem %s5, %s695
        $region128: #{tpu_custom_call.1} parent=123 // pred_fallthru
          _
      $region124: #{tpu_custom_call.1} parent=5 // pred_fallthru
        _
    $region6: #{tpu_custom_call.1} parent=1 // loop_footer
      %s15 = sadd.s32 1, %s11
    $region7: #{tpu_custom_call.1} parent=1 // loop_footer_branch
      %10 = sbr.rel target = $region3
    $region8: #{tpu_custom_call.1} parent=1 // loop_exit
      _

</llo_original>
